<compile_context>
chip_gen: v6e
topology: v6e:2x2x1
jax: 0.10.0
libtpu: 0.0.40
codegen_flags: <defaults>
</compile_context>

<pallas_src>
import jax
import jax.numpy as jnp
from jax.experimental import pallas as pl
from jax.experimental.pallas import tpu as pltpu

D_MODEL = 128
MAX_LEN = 32
DROPOUT_PROB = 0.1  # identity at inference

_MAX_TILE_ROWS = 2048  # rows per output block (2048 * 128 * 4 B = 1 MiB per buffer)


def _round_up(x: int, m: int) -> int:
    return ((x + m - 1) // m) * m


def _choose_tile(n: int) -> int:
    """Rows of output per grid step (multiple of 128 -> lane-dense, unmasked blocks)."""
    if n <= 256:
        # Tiny problems: one step; splitting only adds ~0.35 us/step overhead.
        return _round_up(max(n, 1), 128)
    # >= 2 grid steps so ("parallel",) can shard rows across v7x's 2 TensorCores;
    # cap the block size to amortize per-step overhead on 1-TC chips (v5e/v6e).
    return min(_MAX_TILE_ROWS, _round_up(pl.cdiv(n, 2), 128))


# ----------------------------------------------------------------------------
# Pallas kernel: transposed one-hot MXU gather.  All blocks are lane-dense.
# ----------------------------------------------------------------------------
def _onehot_gather_kernel(ids_ref, table_ref, out_ref):
    # ids_ref:   (1, TILE) int32   lane-dense dense-position ids for this tile
    # table_ref: (L, D)            full embedding table, VMEM-resident
    # out_ref:   (TILE, D)         gathered embeddings
    l = table_ref.shape[0]
    tile = ids_ref.shape[1]
    ids = ids_ref[...]                                              # (1, TILE)
    row = jax.lax.broadcasted_iota(jnp.int32, (l, tile), 0)         # (L, TILE)
    onehot_t = (row == ids).astype(table_ref.dtype)                 # (L, TILE), transposed
    # Contract the sublane dim of both operands: native transposed-LHS matmul.
    # Out-of-range ids (>= L or < 0) match no row -> all-zero output row.
    out_ref[...] = jax.lax.dot_general(
        onehot_t,
        table_ref[...],
        dimension_numbers=(((0,), (0,)), ((), ())),
        preferred_element_type=jnp.float32,
    ).astype(out_ref.dtype)


# ----------------------------------------------------------------------------
# Position-value -> dense id, ordered by first appearance (row-major).
# Stable-sort based, O(n log n); replaces the PyTorch dict `positon2idx`.
# NOTE: this preprocessing dominates the forward cost, not the gather kernel.
# ----------------------------------------------------------------------------
def _first_appearance_mapping(positions):
    flat = positions.reshape(-1).astype(jnp.int32)                  # (n,)
    n = flat.shape[0]
    idx = jnp.arange(n, dtype=jnp.int32)

    # Stable sort by value, carrying original indices (robust across JAX versions).
    sorted_vals, order = jax.lax.sort((flat, idx), num_keys=1, is_stable=True)

    is_start = jnp.concatenate(
        [jnp.ones((1,), bool), sorted_vals[1:] != sorted_vals[:-1]]
    )
    # Broadcast each group's start (sorted) position forward; starts are
    # monotonically increasing so a running max is exact.
    start_pos = jax.lax.cummax(jnp.where(is_start, idx, jnp.int32(-1)))
    first_orig_sorted = order[start_pos]                             # group's first original idx
    firsts = jnp.zeros((n,), jnp.int32).at[order].set(first_orig_sorted)

    is_first = (firsts == idx).astype(jnp.int32)
    excl_cumsum = jnp.cumsum(is_first) - is_first                    # exclusive prefix count
    mapped = excl_cumsum[firsts].astype(jnp.int32)                   # (n,) dense ids
    num_unique = is_first.sum()
    return mapped, num_unique


# ----------------------------------------------------------------------------
# Wrapper around pallas_call
# ----------------------------------------------------------------------------
def _pe_gather(mapped_flat, pe_table):
    """mapped_flat: (n,) int32; pe_table: (max_len, d_model) -> (n, d_model)."""
    n = mapped_flat.shape[0]
    max_len, d_model = pe_table.shape

    tile = _choose_tile(n)
    n_pad = _round_up(n, tile)

    # Lane-dense id row; padding rows use -1 -> all-zero output (sliced off anyway).
    ids = jnp.full((1, n_pad), -1, jnp.int32).at[0, :n].set(mapped_flat)

    out = pl.pallas_call(
        _onehot_gather_kernel,
        out_shape=jax.ShapeDtypeStruct((n_pad, d_model), pe_table.dtype),
        grid=(n_pad // tile,),
        in_specs=[
            pl.BlockSpec((1, tile), lambda i: (0, i)),            # lane-dense ids
            pl.BlockSpec((max_len, d_model), lambda i: (0, 0)),   # full table, resident
        ],
        out_specs=pl.BlockSpec((tile, d_model), lambda i: (i, 0)),
        compiler_params=pltpu.CompilerParams(
            dimension_semantics=("parallel",),                    # rows independent
        ),
    )(ids, pe_table)
    return out[:n]


@jax.jit
def _forward_core(positions, pe_table):
    B, S = positions.shape
    d_model = pe_table.shape[1]
    mapped, num_unique = _first_appearance_mapping(positions)
    pe = _pe_gather(mapped, pe_table).reshape(B, S, d_model)
    # dropout(p=DROPOUT_PROB) is identity at inference.
    return pe, num_unique


def learned_positional_encoding(positions, pe_table, *, validate=True):
    """positions: (B, S) int; pe_table: (max_len, d_model) -> (B, S, d_model).

    `validate=True` reproduces the PyTorch ValueError eagerly (one host sync,
    outside the jitted hot path).  Set validate=False inside larger jitted code
    (note: ids beyond max_len then silently produce zero rows).
    """
    out, num_unique = _forward_core(positions, pe_table)
    if validate:
        nu = int(num_unique)  # device->host sync, only on the validation path
        if nu > pe_table.shape[0]:
            raise ValueError(
                f"Positional encoding length {nu} exceeds maximum length "
                f"{pe_table.shape[0]}"
            )
    return out


if __name__ == "__main__":
    key = jax.random.PRNGKey(0)
    k_pos, k_emb = jax.random.split(key)

    B, S = 2, 8
    # arbitrary (possibly repeated) integer "positions", as the module expects
    positions = jax.random.randint(k_pos, (B, S), 0, 20, dtype=jnp.int32)

    # nn.Embedding(max_len, d_model) default weight ~ N(0, 1)
    pe_table = jax.random.normal(k_emb, (MAX_LEN, D_MODEL), dtype=jnp.float32)

    out = learned_positional_encoding(positions, pe_table)
    out = jax.block_until_ready(out)
    assert out.shape == (B, S, D_MODEL)
    assert out.dtype == jnp.float32

    # Reference: mirror the PyTorch dict-based mapping + embedding lookup.
    p2i = {}
    mapped_ref = []
    for row in jax.device_get(positions).tolist():
        for p in row:
            if p not in p2i:
                p2i[p] = len(p2i)
            mapped_ref.append(p2i[p])
    mapped_ref = jnp.asarray(mapped_ref, jnp.int32).reshape(B, S)
    ref = pe_table[mapped_ref]
    assert jnp.allclose(out, ref), "kernel output mismatch vs reference"

    print("KERNEL_OK")
</pallas_src>

<mosaic_0001>
module attributes {stable_mosaic.version = 11 : i64} {
  func.func @_onehot_gather_kernel(%arg0: i32, %arg1: memref<1x128xi32, #tpu.memory_space<vmem>>, %arg2: memref<32x128xf32, #tpu.memory_space<vmem>>, %arg3: memref<128x128xf32, #tpu.memory_space<vmem>>) attributes {dimension_semantics = [#tpu.dimension_semantics<parallel>], iteration_bounds = array<i64: 1>, scalar_prefetch = 0 : i64, scratch_operands = 0 : i64, tpu.core_type = #tpu.core_type<tc>, window_params = [{transform_indices = @transform_0, window_bounds = array<i64: 1, 128>}, {pipeline_mode = #tpu.pipeline_mode<synchronous>, transform_indices = @transform_1, window_bounds = array<i64: 32, 128>}, {transform_indices = @transform_2, window_bounds = array<i64: 128, 128>}]} {
    %c0 = arith.constant 0 : index
    %c0_0 = arith.constant 0 : index
    %0 = vector.load %arg1[%c0, %c0_0] : memref<1x128xi32, #tpu.memory_space<vmem>>, vector<1x128xi32>
    %1 = tpu.iota {dimensions = array<i32: 0>} : vector<32x128xi32>
    %2 = vector.broadcast %0 : vector<1x128xi32> to vector<32x128xi32>
    %3 = arith.cmpi eq, %1, %2 : vector<32x128xi32>
    %4 = arith.extui %3 : vector<32x128xi1> to vector<32x128xi32>
    %5 = arith.sitofp %4 : vector<32x128xi32> to vector<32x128xf32>
    %c0_1 = arith.constant 0 : index
    %c0_2 = arith.constant 0 : index
    %6 = vector.load %arg2[%c0_1, %c0_2] : memref<32x128xf32, #tpu.memory_space<vmem>>, vector<32x128xf32>
    %cst = arith.constant dense<0.000000e+00> : vector<128x128xf32>
    %7 = tpu.matmul %5, %6, %cst {dimension_numbers = #tpu.dot_dimension_numbers<[0], [0], [1], [1], [0, 1, 1, 1], [], []>} : vector<32x128xf32>, vector<32x128xf32>, vector<128x128xf32> -> vector<128x128xf32>
    %c0_3 = arith.constant 0 : index
    %c0_4 = arith.constant 0 : index
    %8 = vector.load %arg3[%c0_3, %c0_4] : memref<128x128xf32, #tpu.memory_space<vmem>>, vector<128x128xf32>
    tpu.vector_store %arg3[%c0_3, %c0_4], %7 {strides = array<i32>} : memref<128x128xf32, #tpu.memory_space<vmem>>, vector<128x128xf32>,
    return
  }
  func.func @transform_0(%arg0: i32) -> (i32, i32) {
    %c0_i32 = arith.constant 0 : i32
    %c0_i32_0 = arith.constant 0 : i32
    return %c0_i32, %arg0 : i32, i32
  }
  func.func @transform_1(%arg0: i32) -> (i32, i32) {
    %c0_i32 = arith.constant 0 : i32
    %c0_i32_0 = arith.constant 0 : i32
    %c0_i32_1 = arith.constant 0 : i32
    return %c0_i32, %c0_i32_0 : i32, i32
  }
  func.func @transform_2(%arg0: i32) -> (i32, i32) {
    %c0_i32 = arith.constant 0 : i32
    %c0_i32_0 = arith.constant 0 : i32
    return %arg0, %c0_i32 : i32, i32
  }
}

</mosaic_0001>

<llo_original>
// kernel: _forward_core.1
$region0: #{_forward_core.1}
  #allocation0 [shape = 'u32[]', space=smem, size = 0x4, offset = 0x4, fixed_abs, tag = 'smem constant byte address 0x4 - core index']
  #allocation1 [shape = 'u32[144,128]{1,0:T(1,128)}', space=vmem, size = 0x12000, scoped, tag = 'internal scratch']
  %s0 = inlined_call_operand.vmem [shape: s32[1,128], index: 0, kind: input, shape index: {}]
  %s1 = inlined_call_operand.vmem [shape: f32[32,128], index: 1, kind: input, shape index: {}]
  %s2 = inlined_call_operand.vmem [shape: f32[128,128], index: 2, kind: output, shape index: {}]
  %s3 = sld [smem:[#allocation0]]
  $region18: #{_forward_core.1} parent=0
    _
  %s5 = ssub.s32 1, %s3
  %s6 = scalar_select 0, %s5, %s3
  // Predicated region
  $region2: #{_forward_core.1} parent=0 // pred_check
    _
  $region3: #{_forward_core.1} parent=0 // pred_check_branch
    %8 = sbr.rel (0) target = $region5
  $region4: #{_forward_core.1} parent=0 // pred_region
    _
  $region5: #{_forward_core.1} parent=0 // pred_fallthru
    _
  // Predicated region
  $region6: #{_forward_core.1} parent=0 // pred_check
    _
  $region7: #{_forward_core.1} parent=0 // pred_check_branch
    %10 = sbr.rel (0) target = $region9
  $region8: #{_forward_core.1} parent=0 // pred_region
    _
  $region9: #{_forward_core.1} parent=0 // pred_fallthru
    _
  %v11 = vld [vmem:[%s0] sm:$0x1]
  %v12 = vlaneseq
  %v13 = vshrl.u32 %v12, 7
  %v14 = vadd.s32 %v13, 8
  %v15 = vadd.s32 %v13, 16
  %v16 = vadd.s32 %v13, 24
  %v17 = vlaneseq
  %v18 = vshrl.u32 %v17, 7
  %v19 = vsub.s32 0, %v18
  %v20 = vrot.slane %v11, %v19
  %vm21 = vcmp.eq.s32.totalorder %v13, %v20
  %vm22 = vcmp.eq.s32.totalorder %v14, %v20
  %vm23 = vcmp.eq.s32.totalorder %v15, %v20
  %vm24 = vcmp.eq.s32.totalorder %v16, %v20
  %v25 = vsel %vm21, 1, 0
  %v26 = vsel %vm22, 1, 0
  %v27 = vsel %vm23, 1, 0
  %v28 = vsel %vm24, 1, 0
  %v29 = vcvt.s32.f32 %v25
  %v30 = vcvt.s32.f32 %v26
  %v31 = vcvt.s32.f32 %v27
  %v32 = vcvt.s32.f32 %v28
  %v33 = vld [vmem:[%s1] sm:$0xff]
  %v34 = vld [vmem:[%s1 + $0x8] sm:$0xff]
  %v35 = vld [vmem:[%s1 + $0x10] sm:$0xff]
  %v36 = vld [vmem:[%s1 + $0x18] sm:$0xff]
  %37 = vxpose.xlu0.b32.start [1/16] %v29, 128
  %38 = vxpose.xlu0.b32.cont [2/16] %v30, 128
  %39 = vxpose.xlu0.b32.cont [3/16] %v31, 128
  %40 = vxpose.xlu0.b32.cont [4/16] %v32, 128
  %41 = vxpose.xlu0.b32.cont [5/16] 0.0, 128
  %42 = vxpose.xlu0.b32.cont [6/16] 0.0, 128
  %43 = vxpose.xlu0.b32.cont [7/16] 0.0, 128
  %44 = vxpose.xlu0.b32.cont [8/16] 0.0, 128
  %45 = vxpose.xlu0.b32.cont [9/16] 0.0, 128
  %46 = vxpose.xlu0.b32.cont [10/16] 0.0, 128
  %47 = vxpose.xlu0.b32.cont [11/16] 0.0, 128
  %48 = vxpose.xlu0.b32.cont [12/16] 0.0, 128
  %49 = vxpose.xlu0.b32.cont [13/16] 0.0, 128
  %50 = vxpose.xlu0.b32.cont [14/16] 0.0, 128
  %51 = vxpose.xlu0.b32.cont [15/16] 0.0, 128
  %52 = vxpose.xlu0.b32.end [16/16] 0.0, 128
  %v53 = vpop.trf.xlu0
  %v54 = vpop.trf.xlu0
  %v55 = vpop.trf.xlu0
  %v56 = vpop.trf.xlu0
  %v57 = vpop.trf.xlu0
  %v58 = vpop.trf.xlu0
  %v59 = vpop.trf.xlu0
  %v60 = vpop.trf.xlu0
  %v61 = vpop.trf.xlu0
  %v62 = vpop.trf.xlu0
  %v63 = vpop.trf.xlu0
  %v64 = vpop.trf.xlu0
  %v65 = vpop.trf.xlu0
  %v66 = vpop.trf.xlu0
  %v67 = vpop.trf.xlu0
  %v68 = vpop.trf.xlu0
  %vm69 = vcmask 261120
  %v71 = vsel %vm69, %v53, 0
  %v74 = vsel %vm69, %v54, 0
  %v77 = vsel %vm69, %v55, 0
  %v80 = vsel %vm69, %v56, 0
  %v83 = vsel %vm69, %v57, 0
  %v86 = vsel %vm69, %v58, 0
  %v89 = vsel %vm69, %v59, 0
  %v92 = vsel %vm69, %v60, 0
  %v95 = vsel %vm69, %v61, 0
  %v98 = vsel %vm69, %v62, 0
  %v101 = vsel %vm69, %v63, 0
  %v104 = vsel %vm69, %v64, 0
  %v107 = vsel %vm69, %v65, 0
  %v110 = vsel %vm69, %v66, 0
  %v113 = vsel %vm69, %v67, 0
  %v116 = vsel %vm69, %v68, 0
  %118 = vmatprep.subr.mxu0 0.0
  %119 = vmatpush1.msra.mxu0 0.0
  %120 = vmatprep.subr.mxu0 0.0
  %121 = vmatpush1.msra.mxu0 0.0
  %122 = vmatprep.subr.mxu0 0.0
  %123 = vmatpush1.msra.mxu0 0.0
  %124 = vmatprep.subr.mxu0 0.0
  %125 = vmatpush1.msra.mxu0 0.0
  %126 = vmatprep.subr.mxu0 0.0
  %127 = vmatpush1.msra.mxu0 0.0
  %128 = vmatprep.subr.mxu0 0.0
  %129 = vmatpush1.msra.mxu0 0.0
  %130 = vmatprep.subr.mxu0 0.0
  %131 = vmatpush1.msra.mxu0 0.0
  %132 = vmatprep.subr.mxu0 0.0
  %133 = vmatpush1.msra.mxu0 0.0
  %134 = vmatprep.subr.mxu0 0.0
  %135 = vmatpush1.msra.mxu0 0.0
  %136 = vmatprep.subr.mxu0 0.0
  %137 = vmatpush1.msra.mxu0 0.0
  %138 = vmatprep.subr.mxu0 0.0
  %139 = vmatpush1.msra.mxu0 0.0
  %140 = vmatprep.subr.mxu0 0.0
  %141 = vmatpush1.msra.mxu0 0.0
  %142 = vmatprep.subr.mxu0 0.0
  %143 = vmatpush1.msra.mxu0 %v36
  %144 = vmatprep.subr.mxu0 0.0
  %145 = vmatpush1.msra.mxu0 %v35
  %146 = vmatprep.subr.mxu0 0.0
  %147 = vmatpush1.msra.mxu0 %v34
  %148 = vmatprep.subr.mxu0 0.0
  %149 = vmatpush1.msra.mxu0 %v33
  %150 = vmatprep.subr.mxu0 0.0
  %151 = vmatpush2.msra.mxu0 0.0
  %152 = vmatprep.subr.mxu0 0.0
  %153 = vmatpush2.msra.mxu0 0.0
  %154 = vmatprep.subr.mxu0 0.0
  %155 = vmatpush2.msra.mxu0 0.0
  %156 = vmatprep.subr.mxu0 0.0
  %157 = vmatpush2.msra.mxu0 0.0
  %158 = vmatprep.subr.mxu0 0.0
  %159 = vmatpush2.msra.mxu0 0.0
  %160 = vmatprep.subr.mxu0 0.0
  %161 = vmatpush2.msra.mxu0 0.0
  %162 = vmatprep.subr.mxu0 0.0
  %163 = vmatpush2.msra.mxu0 0.0
  %164 = vmatprep.subr.mxu0 0.0
  %165 = vmatpush2.msra.mxu0 0.0
  %166 = vmatprep.subr.mxu0 0.0
  %167 = vmatpush2.msra.mxu0 0.0
  %168 = vmatprep.subr.mxu0 0.0
  %169 = vmatpush2.msra.mxu0 0.0
  %170 = vmatprep.subr.mxu0 0.0
  %171 = vmatpush2.msra.mxu0 0.0
  %172 = vmatprep.subr.mxu0 0.0
  %173 = vmatpush2.msra.mxu0 0.0
  %174 = vmatprep.subr.mxu0 0.0
  %175 = vmatpush2.msra.mxu0 0.0
  %176 = vmatprep.subr.mxu0 0.0
  %177 = vmatpush2.msra.mxu0 0.0
  %178 = vmatprep.subr.mxu0 0.0
  %179 = vmatpush2.msra.mxu0 0.0
  %180 = vmatprep.subr.mxu0 0.0
  %181 = vmatpush2.msra.mxu0 0.0
  %182 = vmatprep.mubr.f32.mxu0 0.0
  %183 = vmatmul.mubr.f32.gmra.mxu0 %v71
  %v184 = vpop.f32.mrf.mxu0
  %v185 = vadd.f32 0.0, %v184
  %v186 = vpop.f32.mrf.mxu0
  %187 = vmatprep.mubr.f32.mxu0 0.0
  %188 = vmatmul.mubr.f32.gmra.mxu0 %v74
  %v189 = vpop.f32.mrf.mxu0
  %v190 = vadd.f32 0.0, %v189
  %v191 = vpop.f32.mrf.mxu0
  %192 = vmatprep.mubr.f32.mxu0 0.0
  %193 = vmatmul.mubr.f32.gmra.mxu0 %v77
  %v194 = vpop.f32.mrf.mxu0
  %v195 = vadd.f32 0.0, %v194
  %v196 = vpop.f32.mrf.mxu0
  %197 = vmatprep.mubr.f32.mxu0 0.0
  %198 = vmatmul.mubr.f32.gmra.mxu0 %v80
  %v199 = vpop.f32.mrf.mxu0
  %v200 = vadd.f32 0.0, %v199
  %v201 = vpop.f32.mrf.mxu0
  %202 = vmatprep.mubr.f32.mxu0 0.0
  %203 = vmatmul.mubr.f32.gmra.mxu0 %v83
  %v204 = vpop.f32.mrf.mxu0
  %v205 = vadd.f32 0.0, %v204
  %v206 = vpop.f32.mrf.mxu0
  %207 = vmatprep.mubr.f32.mxu0 0.0
  %208 = vmatmul.mubr.f32.gmra.mxu0 %v86
  %v209 = vpop.f32.mrf.mxu0
  %v210 = vadd.f32 0.0, %v209
  %v211 = vpop.f32.mrf.mxu0
  %212 = vmatprep.mubr.f32.mxu0 0.0
  %213 = vmatmul.mubr.f32.gmra.mxu0 %v89
  %v214 = vpop.f32.mrf.mxu0
  %v215 = vadd.f32 0.0, %v214
  %v216 = vpop.f32.mrf.mxu0
  %217 = vmatprep.mubr.f32.mxu0 0.0
  %218 = vmatmul.mubr.f32.gmra.mxu0 %v92
  %v219 = vpop.f32.mrf.mxu0
  %v220 = vadd.f32 0.0, %v219
  %v221 = vpop.f32.mrf.mxu0
  %222 = vmatprep.mubr.f32.mxu0 0.0
  %223 = vmatmul.mubr.f32.gmra.mxu0 %v95
  %v224 = vpop.f32.mrf.mxu0
  %v225 = vadd.f32 0.0, %v224
  %v226 = vpop.f32.mrf.mxu0
  %227 = vmatprep.mubr.f32.mxu0 0.0
  %228 = vmatmul.mubr.f32.gmra.mxu0 %v98
  %v229 = vpop.f32.mrf.mxu0
  %v230 = vadd.f32 0.0, %v229
  %v231 = vpop.f32.mrf.mxu0
  %232 = vmatprep.mubr.f32.mxu0 0.0
  %233 = vmatmul.mubr.f32.gmra.mxu0 %v101
  %v234 = vpop.f32.mrf.mxu0
  %v235 = vadd.f32 0.0, %v234
  %v236 = vpop.f32.mrf.mxu0
  %237 = vmatprep.mubr.f32.mxu0 0.0
  %238 = vmatmul.mubr.f32.gmra.mxu0 %v104
  %v239 = vpop.f32.mrf.mxu0
  %v240 = vadd.f32 0.0, %v239
  %v241 = vpop.f32.mrf.mxu0
  %242 = vmatprep.mubr.f32.mxu0 0.0
  %243 = vmatmul.mubr.f32.gmra.mxu0 %v107
  %v244 = vpop.f32.mrf.mxu0
  %v245 = vadd.f32 0.0, %v244
  %v246 = vpop.f32.mrf.mxu0
  %247 = vmatprep.mubr.f32.mxu0 0.0
  %248 = vmatmul.mubr.f32.gmra.mxu0 %v110
  %v249 = vpop.f32.mrf.mxu0
  %v250 = vadd.f32 0.0, %v249
  %v251 = vpop.f32.mrf.mxu0
  %252 = vmatprep.mubr.f32.mxu0 0.0
  %253 = vmatmul.mubr.f32.gmra.mxu0 %v113
  %v254 = vpop.f32.mrf.mxu0
  %v255 = vadd.f32 0.0, %v254
  %v256 = vpop.f32.mrf.mxu0
  %257 = vmatprep.mubr.f32.mxu0 0.0
  %258 = vmatmul.mubr.f32.gmra.mxu0 %v116
  %v259 = vpop.f32.mrf.mxu0
  %v260 = vadd.f32 0.0, %v259
  %v261 = vpop.f32.mrf.mxu0
  %262 = vdwg.mxu0
  %263 = vst [vmem:[%s2] sm:$0xff] %v185
  %264 = vst [vmem:[%s2 + $0x8] sm:$0xff] %v190
  %265 = vst [vmem:[%s2 + $0x10] sm:$0xff] %v195
  %266 = vst [vmem:[%s2 + $0x18] sm:$0xff] %v200
  %267 = vst [vmem:[%s2 + $0x20] sm:$0xff] %v205
  %268 = vst [vmem:[%s2 + $0x28] sm:$0xff] %v210
  %269 = vst [vmem:[%s2 + $0x30] sm:$0xff] %v215
  %270 = vst [vmem:[%s2 + $0x38] sm:$0xff] %v220
  %271 = vst [vmem:[%s2 + $0x40] sm:$0xff] %v225
  %272 = vst [vmem:[%s2 + $0x48] sm:$0xff] %v230
  %273 = vst [vmem:[%s2 + $0x50] sm:$0xff] %v235
  %274 = vst [vmem:[%s2 + $0x58] sm:$0xff] %v240
  %275 = vst [vmem:[%s2 + $0x60] sm:$0xff] %v245
  %276 = vst [vmem:[%s2 + $0x68] sm:$0xff] %v250
  %277 = vst [vmem:[%s2 + $0x70] sm:$0xff] %v255
  %278 = vst [vmem:[%s2 + $0x78] sm:$0xff] %v260
  // Predicated region
  $region10: #{_forward_core.1} parent=0 // pred_check
    _
  $region11: #{_forward_core.1} parent=0 // pred_check_branch
    %280 = sbr.rel (0) target = $region13
  $region12: #{_forward_core.1} parent=0 // pred_region
    _
  $region13: #{_forward_core.1} parent=0 // pred_fallthru
    _
  // Predicated region
  $region14: #{_forward_core.1} parent=0 // pred_check
    _
  $region15: #{_forward_core.1} parent=0 // pred_check_branch
    %282 = sbr.rel (0) target = $region17
  $region16: #{_forward_core.1} parent=0 // pred_region
    _
  $region17: #{_forward_core.1} parent=0 // pred_fallthru
    _

</llo_original>
